<compile_context>
chip_gen: v7x
topology: tpu7x:2x2x1
jax: 0.10.0
libtpu: 0.0.40
codegen_flags: <defaults>
</compile_context>

<pallas_src>
import functools

import jax
import jax.numpy as jnp
from jax.experimental import pallas as pl
from jax.experimental.pallas import tpu as pltpu

_LANES = 128


def _round_up(x, m):
    return ((x + m - 1) // m) * m


def _dice_partial_kernel(logit_ref, truth_ref, inter_ref, union_ref,
                         *, w0, w1, m_valid, tm, k_per_split, needs_mask):
    """Accumulate per-batch, lane-wide partial sums of p*t and p*p + t*t."""
    k = pl.program_id(1)                      # reduction step within this split

    @pl.when(k == 0)
    def _():
        inter_ref[...] = jnp.zeros_like(inter_ref)
        union_ref[...] = jnp.zeros_like(union_ref)

    p = logit_ref[...].astype(jnp.float32)    # (B, tm, 128)
    t = truth_ref[...].astype(jnp.float32)

    if needs_mask:
        # Zero rows beyond the valid M rows (ragged tail and/or fully
        # out-of-range duplicate blocks of the second split).  Use a select
        # (not a multiply) so undefined out-of-bounds data can never poison
        # the sums.  The mask uses the *unclamped* logical block index.
        blk = pl.program_id(0) * k_per_split + k
        rows = blk * tm + jax.lax.broadcasted_iota(jnp.int32, p.shape, 1)
        valid = rows < m_valid
        zeros = jnp.zeros_like(p)
        p = jnp.where(valid, p, zeros)
        t = jnp.where(valid, t, zeros)

    dw = w1 - w0
    if dw != 0.0:
        w = t * dw + w0          # w = truth*(w1-w0) + w0
        p = w * p
        t = w * t
    # else: constant weight w0 is folded into the JAX epilogue (w0**2 scale),
    # saving two vector multiplies per element in the hot loop.

    # Only the sublane (row) axis is reduced per step; the cross-lane reduce
    # happens once in the JAX epilogue.
    inter_ref[...] += jnp.sum(p * t, axis=1)
    union_ref[...] += jnp.sum(p * p + t * t, axis=1)


def weighted_dice_loss(logit, truth, weights=(0.5, 0.5), smooth=1e-05,
                       block_rows=None, vmem_limit_bytes=32 * 1024 * 1024):
    """Pallas implementation of WeightedDiceLoss.forward."""
    batch_size = logit.shape[0]
    logit = logit.reshape(batch_size, -1)
    truth = truth.reshape(batch_size, -1)
    assert logit.shape == truth.shape
    n = logit.shape[1]

    # Lane-align N.  A multiple-of-128 N (the common segmentation case) is a
    # free, layout-compatible reshape; only a ragged lane remainder pays for a
    # pad copy.
    if n % _LANES != 0:
        # TODO(synk): the sub-128 tail could be folded into a JAX epilogue to
        # avoid this copy entirely; left as a small pad since it is rare.
        pad = _LANES - n % _LANES
        logit = jnp.pad(logit, ((0, 0), (0, pad)))
        truth = jnp.pad(truth, ((0, 0), (0, pad)))
    m = logit.shape[1] // _LANES

    logit3 = logit.reshape(batch_size, m, _LANES)   # free reshape
    truth3 = truth.reshape(batch_size, m, _LANES)

    # ---- block-size selection from a VMEM budget --------------------------
    itemsize = max(logit3.dtype.itemsize, truth3.dtype.itemsize)
    if block_rows is None:
        budget_bytes = 2 * 1024 * 1024          # ~2 MiB per input block
        block_rows = budget_bytes // (batch_size * _LANES * itemsize)
    # Keep at least ~4 row-blocks when there is enough data (pipeline + 2-core
    # split), round to sublane multiples, never exceed the data itself.
    block_rows = min(block_rows, max(1, pl.cdiv(m, 4)))
    tm = max(8, min(_round_up(block_rows, 8), _round_up(m, 8)))

    nb = pl.cdiv(m, tm)                      # number of row-blocks
    n_split = 2 if nb >= 2 else 1            # shard reduction over 2 TCs (v7x)
    k_per_split = pl.cdiv(nb, n_split)
    needs_mask = (n_split * k_per_split * tm) != m
    nb_last = nb - 1

    def in_map(s, k):
        # Clamp so a fully out-of-range block never issues an OOB DMA; the
        # in-kernel row mask zeroes any duplicate / overhanging rows.
        return (0, jnp.minimum(s * k_per_split + k, nb_last), 0)

    in_spec = pl.BlockSpec((batch_size, tm, _LANES), in_map)
    out_spec = pl.BlockSpec((None, batch_size, _LANES), lambda s, k: (s, 0, 0))
    out_sds = jax.ShapeDtypeStruct((n_split, batch_size, _LANES), jnp.float32)

    w0 = float(weights[0])
    w1 = float(weights[1])
    kernel = functools.partial(
        _dice_partial_kernel,
        w0=w0, w1=w1,
        m_valid=m, tm=tm, k_per_split=k_per_split, needs_mask=needs_mask)

    inter, union = pl.pallas_call(
        kernel,
        out_shape=[out_sds, out_sds],
        grid_spec=pltpu.PrefetchScalarGridSpec(
            num_scalar_prefetch=0,
            grid=(n_split, k_per_split),
            in_specs=[in_spec, in_spec],
            out_specs=[out_spec, out_spec],
        ),
        compiler_params=pltpu.CompilerParams(
            dimension_semantics=("parallel", "arbitrary"),
            vmem_limit_bytes=vmem_limit_bytes),
    )(logit3, truth3)

    # Tiny JAX epilogue: combine split/lane partials, compute dice, mean.
    scale = 1.0 if (w1 - w0) != 0.0 else w0 * w0   # constant-weight fold
    inter_b = scale * inter.sum(axis=(0, 2))
    union_b = scale * union.sum(axis=(0, 2))
    dice = 1.0 - (2.0 * inter_b + smooth) / (union_b + smooth)
    return dice.mean()


def _reference(logit, truth, weights=(0.5, 0.5), smooth=1e-05):
    b = logit.shape[0]
    p = logit.reshape(b, -1).astype(jnp.float32)
    t = truth.reshape(b, -1).astype(jnp.float32)
    w = t * (weights[1] - weights[0]) + weights[0]
    p = w * p
    t = w * t
    inter = (p * t).sum(-1)
    union = (p * p).sum(-1) + (t * t).sum(-1)
    dice = 1.0 - (2.0 * inter + smooth) / (union + smooth)
    return dice.mean()


if __name__ == "__main__":
    key = jax.random.PRNGKey(0)
    k1, k2, k3, k4 = jax.random.split(key, 4)

    # Test 1: NCHW segmentation-style input, equal weights (constant-w path,
    # weight folded into the epilogue).
    B, C, H, W = 2, 4, 16, 16
    logit1 = jax.nn.sigmoid(jax.random.normal(k1, (B, C, H, W), jnp.float32))
    truth1 = (jax.random.uniform(k2, (B, C, H, W)) > 0.5).astype(jnp.float32)
    loss1 = jax.block_until_ready(
        weighted_dice_loss(logit1, truth1, weights=(0.5, 0.5)))
    ref1 = _reference(logit1, truth1, weights=(0.5, 0.5))
    assert jnp.allclose(loss1, ref1, atol=1e-5, rtol=1e-5), (loss1, ref1)

    # Test 2: non-square spatial extent exercising the 2-way split + the
    # ragged-row mask, with unequal class weights (in-kernel w path).
    B2, C2, H2, W2 = 2, 4, 16, 24
    logit2 = jax.nn.sigmoid(jax.random.normal(k3, (B2, C2, H2, W2), jnp.float32))
    truth2 = (jax.random.uniform(k4, (B2, C2, H2, W2)) > 0.5).astype(jnp.float32)
    loss2 = jax.block_until_ready(
        weighted_dice_loss(logit2, truth2, weights=(0.3, 0.7)))
    ref2 = _reference(logit2, truth2, weights=(0.3, 0.7))
    assert jnp.allclose(loss2, ref2, atol=1e-5, rtol=1e-5), (loss2, ref2)

    print("KERNEL_OK")
</pallas_src>

<mosaic_0001>
module attributes {stable_mosaic.version = 11 : i64} {
  func.func @_dice_partial_kernel(%arg0: i32, %arg1: i32, %arg2: memref<2x8x128xf32, #tpu.memory_space<vmem>>, %arg3: memref<2x8x128xf32, #tpu.memory_space<vmem>>, %arg4: memref<1x2x128xf32, #tpu.memory_space<vmem>>, %arg5: memref<1x2x128xf32, #tpu.memory_space<vmem>>) attributes {dimension_semantics = [#tpu.dimension_semantics<parallel>, #tpu.dimension_semantics<arbitrary>], iteration_bounds = array<i64: 1, 1>, scalar_prefetch = 0 : i64, scratch_operands = 0 : i64, tpu.core_type = #tpu.core_type<tc>, window_params = [{transform_indices = @transform_0, window_bounds = array<i64: 2, 8, 128>}, {transform_indices = @transform_1, window_bounds = array<i64: 2, 8, 128>}, {transform_indices = @transform_2, window_bounds = array<i64: 1, 2, 128>}, {transform_indices = @transform_3, window_bounds = array<i64: 1, 2, 128>}]} {
    %c0_i32 = arith.constant 0 : i32
    %0 = arith.cmpi eq, %arg1, %c0_i32 : i32
    %1 = arith.extui %0 : i1 to i32
    %c0_i32_0 = arith.constant 0 : i32
    %2 = arith.cmpi ne, %1, %c0_i32_0 : i32
    scf.if %2 {
      %cst_19 = arith.constant 0.000000e+00 : f32
      %23 = vector.broadcast %cst_19 : f32 to vector<2x128xf32>
      %c0_20 = arith.constant 0 : index
      %c0_21 = arith.constant 0 : index
      %c0_22 = arith.constant 0 : index
      %24 = vector.load %arg4[%c0_20, %c0_21, %c0_22] : memref<1x2x128xf32, #tpu.memory_space<vmem>>, vector<1x2x128xf32>
      %25 = vector.shape_cast %24 : vector<1x2x128xf32> to vector<2x128xf32>
      %26 = vector.shape_cast %23 : vector<2x128xf32> to vector<1x2x128xf32>
      tpu.vector_store %arg4[%c0_20, %c0_21, %c0_22], %26 {strides = array<i32>} : memref<1x2x128xf32, #tpu.memory_space<vmem>>, vector<1x2x128xf32>,
      %cst_23 = arith.constant 0.000000e+00 : f32
      %27 = vector.broadcast %cst_23 : f32 to vector<2x128xf32>
      %c0_24 = arith.constant 0 : index
      %c0_25 = arith.constant 0 : index
      %c0_26 = arith.constant 0 : index
      %28 = vector.load %arg5[%c0_24, %c0_25, %c0_26] : memref<1x2x128xf32, #tpu.memory_space<vmem>>, vector<1x2x128xf32>
      %29 = vector.shape_cast %28 : vector<1x2x128xf32> to vector<2x128xf32>
      %30 = vector.shape_cast %27 : vector<2x128xf32> to vector<1x2x128xf32>
      tpu.vector_store %arg5[%c0_24, %c0_25, %c0_26], %30 {strides = array<i32>} : memref<1x2x128xf32, #tpu.memory_space<vmem>>, vector<1x2x128xf32>,
    } else {
    }
    %c0 = arith.constant 0 : index
    %c0_1 = arith.constant 0 : index
    %c0_2 = arith.constant 0 : index
    %3 = vector.load %arg2[%c0, %c0_1, %c0_2] : memref<2x8x128xf32, #tpu.memory_space<vmem>>, vector<2x8x128xf32>
    %c0_3 = arith.constant 0 : index
    %c0_4 = arith.constant 0 : index
    %c0_5 = arith.constant 0 : index
    %4 = vector.load %arg3[%c0_3, %c0_4, %c0_5] : memref<2x8x128xf32, #tpu.memory_space<vmem>>, vector<2x8x128xf32>
    %c0_6 = arith.constant 0 : index
    %c0_7 = arith.constant 0 : index
    %c0_8 = arith.constant 0 : index
    %5 = vector.load %arg4[%c0_6, %c0_7, %c0_8] : memref<1x2x128xf32, #tpu.memory_space<vmem>>, vector<1x2x128xf32>
    %6 = vector.shape_cast %5 : vector<1x2x128xf32> to vector<2x128xf32>
    %7 = arith.mulf %3, %4 : vector<2x8x128xf32>
    %cst = arith.constant dense<0.000000e+00> : vector<2x128xf32>
    %8 = vector.multi_reduction <add>, %7, %cst [1] : vector<2x8x128xf32> to vector<2x128xf32>
    %9 = arith.addf %6, %8 : vector<2x128xf32>
    %c0_9 = arith.constant 0 : index
    %c0_10 = arith.constant 0 : index
    %c0_11 = arith.constant 0 : index
    %10 = vector.load %arg4[%c0_9, %c0_10, %c0_11] : memref<1x2x128xf32, #tpu.memory_space<vmem>>, vector<1x2x128xf32>
    %11 = vector.shape_cast %10 : vector<1x2x128xf32> to vector<2x128xf32>
    %12 = vector.shape_cast %9 : vector<2x128xf32> to vector<1x2x128xf32>
    tpu.vector_store %arg4[%c0_9, %c0_10, %c0_11], %12 {strides = array<i32>} : memref<1x2x128xf32, #tpu.memory_space<vmem>>, vector<1x2x128xf32>,
    %c0_12 = arith.constant 0 : index
    %c0_13 = arith.constant 0 : index
    %c0_14 = arith.constant 0 : index
    %13 = vector.load %arg5[%c0_12, %c0_13, %c0_14] : memref<1x2x128xf32, #tpu.memory_space<vmem>>, vector<1x2x128xf32>
    %14 = vector.shape_cast %13 : vector<1x2x128xf32> to vector<2x128xf32>
    %15 = arith.mulf %3, %3 : vector<2x8x128xf32>
    %16 = arith.mulf %4, %4 : vector<2x8x128xf32>
    %17 = arith.addf %15, %16 : vector<2x8x128xf32>
    %cst_15 = arith.constant dense<0.000000e+00> : vector<2x128xf32>
    %18 = vector.multi_reduction <add>, %17, %cst_15 [1] : vector<2x8x128xf32> to vector<2x128xf32>
    %19 = arith.addf %14, %18 : vector<2x128xf32>
    %c0_16 = arith.constant 0 : index
    %c0_17 = arith.constant 0 : index
    %c0_18 = arith.constant 0 : index
    %20 = vector.load %arg5[%c0_16, %c0_17, %c0_18] : memref<1x2x128xf32, #tpu.memory_space<vmem>>, vector<1x2x128xf32>
    %21 = vector.shape_cast %20 : vector<1x2x128xf32> to vector<2x128xf32>
    %22 = vector.shape_cast %19 : vector<2x128xf32> to vector<1x2x128xf32>
    tpu.vector_store %arg5[%c0_16, %c0_17, %c0_18], %22 {strides = array<i32>} : memref<1x2x128xf32, #tpu.memory_space<vmem>>, vector<1x2x128xf32>,
    return
  }
  func.func @transform_0(%arg0: i32, %arg1: i32) -> (i32, i32, i32) {
    %c1_i32 = arith.constant 1 : i32
    %0 = arith.muli %arg0, %c1_i32 : i32
    %1 = arith.addi %0, %arg1 : i32
    %c0_i32 = arith.constant 0 : i32
    %2 = arith.minsi %1, %c0_i32 : i32
    %c0_i32_0 = arith.constant 0 : i32
    %c0_i32_1 = arith.constant 0 : i32
    %c0_i32_2 = arith.constant 0 : i32
    return %c0_i32_0, %2, %c0_i32_1 : i32, i32, i32
  }
  func.func @transform_1(%arg0: i32, %arg1: i32) -> (i32, i32, i32) {
    %c1_i32 = arith.constant 1 : i32
    %0 = arith.muli %arg0, %c1_i32 : i32
    %1 = arith.addi %0, %arg1 : i32
    %c0_i32 = arith.constant 0 : i32
    %2 = arith.minsi %1, %c0_i32 : i32
    %c0_i32_0 = arith.constant 0 : i32
    %c0_i32_1 = arith.constant 0 : i32
    %c0_i32_2 = arith.constant 0 : i32
    return %c0_i32_0, %2, %c0_i32_1 : i32, i32, i32
  }
  func.func @transform_2(%arg0: i32, %arg1: i32) -> (i32, i32, i32) {
    %c0_i32 = arith.constant 0 : i32
    %c0_i32_0 = arith.constant 0 : i32
    %c0_i32_1 = arith.constant 0 : i32
    return %arg0, %c0_i32, %c0_i32_0 : i32, i32, i32
  }
  func.func @transform_3(%arg0: i32, %arg1: i32) -> (i32, i32, i32) {
    %c0_i32 = arith.constant 0 : i32
    %c0_i32_0 = arith.constant 0 : i32
    %c0_i32_1 = arith.constant 0 : i32
    return %arg0, %c0_i32, %c0_i32_0 : i32, i32, i32
  }
}

</mosaic_0001>

<llo_original>
// kernel: tpu_custom_call.1
$region0: #{tpu_custom_call.1}
  #allocation0 [shape = 'u32[]', space=smem, size = 0x4, offset = 0x4, fixed_abs, tag = 'smem constant byte address 0x4 - core index']
  #allocation1 [shape = 'u32[144,128]{1,0:T(1,128)}', space=vmem, size = 0x12000, scoped, tag = 'internal scratch']
  %s0 = inlined_call_operand.hbm [shape: f32[2,8,128], index: 0, kind: input, shape index: {}]
  %s1 = inlined_call_operand.hbm [shape: f32[2,8,128], index: 1, kind: input, shape index: {}]
  %s2 = inlined_call_operand.hbm [shape: f32[1,2,128], index: 2, kind: output, shape index: {0}]
  %s3 = inlined_call_operand.hbm [shape: f32[1,2,128], index: 3, kind: output, shape index: {1}]
  %4 = xla_tuple %s2, %s3
  %s5 = sld [smem:[#allocation0]]
  $region38: #{tpu_custom_call.1} parent=0
    _
  %s7 = ssub.s32 1, %s5
  %s8 = scalar_select 0, %s7, %s5
  $region1: #{tpu_custom_call.1} parent=0
    #allocation2 [shape = 'u8[8192]{0}', space=vmem, size = 0x2000, scoped, tag = 'input window, operand 0, single buffered']
    #allocation3 [shape = 's32[1]{0}', space=sflag, size = 0x4, scoped, tag = 'scoped memory for tpu_custom_call.1']
    #allocation4 [shape = 's32[1]{0}', space=sflag, size = 0x4, scoped, tag = 'scoped memory for tpu_custom_call.1']
    #allocation5 [shape = 'u8[8192]{0}', space=vmem, size = 0x2000, scoped, tag = 'input window, operand 1, single buffered']
    #allocation6 [shape = 's32[1]{0}', space=sflag, size = 0x4, scoped, tag = 'scoped memory for tpu_custom_call.1']
    #allocation7 [shape = 'u8[1024]{0}', space=vmem, size = 0x400, scoped, tag = 'output window, operand 0, single buffered']
    #allocation8 [shape = 'u8[1024]{0}', space=vmem, size = 0x400, scoped, tag = 'output window, operand 1, single buffered']
    #allocation9 [shape = 's32[1]{0}', space=sflag, size = 0x4, scoped, tag = 'scoped memory for tpu_custom_call.1']
    %9 = vsyncpa [#allocation3], 0
    %10 = vsyncpa [#allocation6], 0
    %11 = vsyncpa [#allocation4], 0
    %12 = vsyncpa [#allocation9], 0
    // Predicated region
    $region2: #{tpu_custom_call.1} parent=1 // pred_check
      _
    $region3: #{tpu_custom_call.1} parent=1 // pred_check_branch
      %14 = sbr.rel (0) target = $region5
    $region4: #{tpu_custom_call.1} parent=1 // pred_region
      %s15 = sadd.s32 0, 0
      %p16 = scmp.lt.s32.totalorder %s15, 0
      %s17 = scalar_select %p16, %s15, 0
      %s19 = ssub.s32 256, 256
      %20 = vsyncadd [#allocation3], %s19
      %s21 = smul.addr %s17, 128
      %s22 = scalar_lea.hbm %s0, %s21
      %s23 = sshll.u32 [#allocation2], 4
      %s24 = int_to_ptr.vmem [resolvable:$true] %s23
      %29 = dma.hbm_to_vmem [thread:$0]  %s22, 256, %s24, [#allocation3], 128, 128, 8
    $region5: #{tpu_custom_call.1} parent=1 // pred_fallthru
      _
    // Predicated region
    $region6: #{tpu_custom_call.1} parent=1 // pred_check
      _
    $region7: #{tpu_custom_call.1} parent=1 // pred_check_branch
      %31 = sbr.rel (0) target = $region9
    $region8: #{tpu_custom_call.1} parent=1 // pred_region
      %s32 = sadd.s32 0, 0
      %p33 = scmp.lt.s32.totalorder %s32, 0
      %s34 = scalar_select %p33, %s32, 0
      %s36 = ssub.s32 256, 256
      %37 = vsyncadd [#allocation6], %s36
      %s38 = smul.addr %s34, 128
      %s39 = scalar_lea.hbm %s1, %s38
      %s40 = sshll.u32 [#allocation5], 4
      %s41 = int_to_ptr.vmem [resolvable:$true] %s40
      %46 = dma.hbm_to_vmem [thread:$0]  %s39, 256, %s41, [#allocation6], 128, 128, 8
    $region9: #{tpu_custom_call.1} parent=1 // pred_fallthru
      _
    // Predicated region
    $region10: #{tpu_custom_call.1} parent=1 // pred_check
      _
    $region11: #{tpu_custom_call.1} parent=1 // pred_check_branch
      %48 = sbr.rel (0) target = $region13
    $region12: #{tpu_custom_call.1} parent=1 // pred_region
      %49 = dma.done [#allocation3], 256
    $region13: #{tpu_custom_call.1} parent=1 // pred_fallthru
      _
    // Predicated region
    $region14: #{tpu_custom_call.1} parent=1 // pred_check
      _
    $region15: #{tpu_custom_call.1} parent=1 // pred_check_branch
      %51 = sbr.rel (0) target = $region17
    $region16: #{tpu_custom_call.1} parent=1 // pred_region
      %52 = dma.done [#allocation6], 256
    $region17: #{tpu_custom_call.1} parent=1 // pred_fallthru
      _
    %s53 = sadd.s32 0, 0
    %p54 = scmp.lt.s32.totalorder %s53, 0
    %s55 = scalar_select %p54, %s53, 0
    %s56 = sadd.s32 0, 0
    %p57 = scmp.lt.s32.totalorder %s56, 0
    %s58 = scalar_select %p57, %s56, 0
    %p59 = scmp.eq.s32.totalorder 0, 0
    // Predicated region
    $region18: #{tpu_custom_call.1} parent=1 // pred_check
      %p60 = pneg %p59
    $region19: #{tpu_custom_call.1} parent=1 // pred_check_branch
      %62 = sbr.rel (%p60) target = $region21
    $region20: #{tpu_custom_call.1} parent=1 // pred_region
      %63 = vst [vmem:[#allocation7] sm:$0x3] 0.0
      %64 = vst [vmem:[#allocation8] sm:$0x3] 0.0
    $region21: #{tpu_custom_call.1} parent=1 // pred_fallthru
      _
    %v65 = vld [vmem:[#allocation2] sm:$0xff]
    %v66 = vld [vmem:[#allocation2 + $0x8] sm:$0xff]
    %v67 = vld [vmem:[#allocation5] sm:$0xff]
    %v68 = vld [vmem:[#allocation5 + $0x8] sm:$0xff]
    %v69 = vld [vmem:[#allocation7] sm:$0x3]
    %v70 = vmul.f32 %v65, %v67
    %v71 = vmul.f32 %v66, %v68
    %v72 = vrot.slane %v70, 4
    %v73 = vadd.f32 %v70, %v72
    %v74 = vrot.slane %v73, 2
    %v75 = vadd.f32 %v73, %v74
    %v76 = vrot.slane %v75, 1
    %v77 = vadd.f32 %v75, %v76
    %v78 = vrot.slane %v71, 4
    %v79 = vadd.f32 %v71, %v78
    %v80 = vrot.slane %v79, 2
    %v81 = vadd.f32 %v79, %v80
    %v82 = vrot.slane %v81, 1
    %v83 = vadd.f32 %v81, %v82
    %vm86 = vcmask 1041409
    %v87 = vsel %vm86, %v83, %v77
    %v89 = vadd.f32 %v69, %v87
    %90 = vst [vmem:[#allocation7] sm:$0x3] %v89
    %v91 = vld [vmem:[#allocation8] sm:$0x3]
    %v92 = vmul.f32 %v65, %v65
    %v93 = vmul.f32 %v66, %v66
    %v94 = vmul.f32 %v67, %v67
    %v95 = vmul.f32 %v68, %v68
    %v96 = vadd.f32 %v92, %v94
    %v97 = vadd.f32 %v93, %v95
    %v98 = vrot.slane %v96, 4
    %v99 = vadd.f32 %v96, %v98
    %v100 = vrot.slane %v99, 2
    %v101 = vadd.f32 %v99, %v100
    %v102 = vrot.slane %v101, 1
    %v103 = vadd.f32 %v101, %v102
    %v104 = vrot.slane %v97, 4
    %v105 = vadd.f32 %v97, %v104
    %v106 = vrot.slane %v105, 2
    %v107 = vadd.f32 %v105, %v106
    %v108 = vrot.slane %v107, 1
    %v109 = vadd.f32 %v107, %v108
    %v112 = vsel %vm86, %v109, %v103
    %v114 = vadd.f32 %v91, %v112
    %115 = vst [vmem:[#allocation8] sm:$0x3] %v114
    // Predicated region
    $region22: #{tpu_custom_call.1} parent=1 // pred_check
      _
    $region23: #{tpu_custom_call.1} parent=1 // pred_check_branch
      %117 = sbr.rel (0) target = $region25
    $region24: #{tpu_custom_call.1} parent=1 // pred_region
      %s119 = ssub.s32 32, 32
      %120 = vsyncadd [#allocation4], %s119
      %s122 = sshll.u32 [#allocation7], 4
      %s123 = int_to_ptr.vmem [resolvable:$true] %s122
      %125 = dma.vmem_to_hbm [thread:$0]  %s123, 32, %s2, [#allocation4]
    $region25: #{tpu_custom_call.1} parent=1 // pred_fallthru
      _
    // Predicated region
    $region26: #{tpu_custom_call.1} parent=1 // pred_check
      _
    $region27: #{tpu_custom_call.1} parent=1 // pred_check_branch
      %127 = sbr.rel (0) target = $region29
    $region28: #{tpu_custom_call.1} parent=1 // pred_region
      %s129 = ssub.s32 32, 32
      %130 = vsyncadd [#allocation9], %s129
      %s132 = sshll.u32 [#allocation8], 4
      %s133 = int_to_ptr.vmem [resolvable:$true] %s132
      %135 = dma.vmem_to_hbm [thread:$0]  %s133, 32, %s3, [#allocation9]
    $region29: #{tpu_custom_call.1} parent=1 // pred_fallthru
      _
    // Predicated region
    $region30: #{tpu_custom_call.1} parent=1 // pred_check
      _
    $region31: #{tpu_custom_call.1} parent=1 // pred_check_branch
      %137 = sbr.rel (0) target = $region33
    $region32: #{tpu_custom_call.1} parent=1 // pred_region
      %138 = dma.done [#allocation4], 32
    $region33: #{tpu_custom_call.1} parent=1 // pred_fallthru
      _
    // Predicated region
    $region34: #{tpu_custom_call.1} parent=1 // pred_check
      _
    $region35: #{tpu_custom_call.1} parent=1 // pred_check_branch
      %140 = sbr.rel (0) target = $region37
    $region36: #{tpu_custom_call.1} parent=1 // pred_region
      %141 = dma.done [#allocation9], 32
    $region37: #{tpu_custom_call.1} parent=1 // pred_fallthru
      _
    %142 = vsyncpa [#allocation3], 1
    %143 = vsyncpa [#allocation6], 1
    %144 = vsyncpa [#allocation4], 1
    %145 = vsyncpa [#allocation9], 1

</llo_original>
